<compile_context>
chip_gen: v5e
topology: v5e:2x2
jax: 0.10.0
libtpu: 0.0.40
codegen_flags: <defaults>
</compile_context>

<pallas_src>
import functools

import numpy as np
import jax
import jax.numpy as jnp
from jax.experimental import pallas as pl
from jax.experimental.pallas import tpu as pltpu

LANE = 128
SUBLANE = 8


def _round_up(x, m):
    return (x + m - 1) // m * m


# ---------------------------------------------------------------------------
# goal_emb as a linear map:  vec = [state | goal] @ E   (built once, host-side)
# ---------------------------------------------------------------------------
def _goal_emb_matrix(state_dim, goal_dim):
    in_dim = state_dim + 2 * goal_dim
    E = np.zeros((state_dim + goal_dim, in_dim), np.float32)
    E[:state_dim, :state_dim] = np.eye(state_dim, dtype=np.float32)
    if goal_dim == 6:
        # (goal offset, state offset) for each 3-vector difference
        pairs = [(0, 6), (0, 9), (3, 6), (3, 9)]
    else:
        pairs = [(0, 6), (3, 6), (6, 6), (9, 6),
                 (0, 9), (3, 9), (6, 9), (9, 9)]
    for k, (g_off, s_off) in enumerate(pairs):
        col = state_dim + 3 * k
        for d in range(3):
            E[state_dim + g_off + d, col + d] += 1.0
            E[s_off + d, col + d] -= 1.0
    return E


def _segment_offsets(Kp, C):
    """Slab layout: every segment 8-row aligned, C lanes wide, W1 fused (Kp rows)."""
    offs, off = {}, 0
    for name, rows in (("w1", Kp), ("b1", SUBLANE),
                       ("w2", C), ("b2", SUBLANE),
                       ("w3", C), ("b3", SUBLANE)):
        offs[name] = off
        off += rows
    return offs, off


# ---------------------------------------------------------------------------
# Parameter packing: fold goal_emb into W1, pack everything into one slab.
# ---------------------------------------------------------------------------
def pack_params(params, state_dim, goal_dim, hidden_dim, action_dim,
                dtype=jnp.float32):
    C = _round_up(max(hidden_dim, action_dim), LANE)
    Kp = _round_up(state_dim + goal_dim, SUBLANE)
    offs, total_rows = _segment_offsets(Kp, C)

    E = jnp.asarray(_goal_emb_matrix(state_dim, goal_dim))
    w1_eff = jnp.dot(E, params["w1"])                 # (state_dim+goal_dim, hidden)

    slab = jnp.zeros((total_rows, C), jnp.float32)

    def put(s, name, mat):
        r0 = offs[name]
        return s.at[r0:r0 + mat.shape[0], :mat.shape[1]].set(mat)

    slab = put(slab, "w1", w1_eff)                    # zero-padded to Kp rows
    slab = put(slab, "b1", params["b1"])
    slab = put(slab, "w2", params["w2"])
    slab = put(slab, "b2", params["b2"])
    slab = put(slab, "w3", params["w3"])
    slab = put(slab, "b3", params["b3"])
    return slab.astype(dtype)


# ---------------------------------------------------------------------------
# Fused kernel: layer1 (single aligned matmul) -> relu -> layer2 -> relu
#               -> layer3 -> max_action * tanh  (lane-dense padded store)
# ---------------------------------------------------------------------------
def _actor_kernel(ma_ref, x_ref, p_ref, o_ref, *, offs, Kp, C, AP):
    wdt = p_ref.dtype
    x = x_ref[...].astype(wdt)

    w1 = p_ref[offs["w1"]:offs["w1"] + Kp, :]
    b1 = p_ref[offs["b1"]:offs["b1"] + 1, :].astype(jnp.float32)
    w2 = p_ref[offs["w2"]:offs["w2"] + C, :]
    b2 = p_ref[offs["b2"]:offs["b2"] + 1, :].astype(jnp.float32)
    w3 = p_ref[offs["w3"]:offs["w3"] + C, :]
    b3 = p_ref[offs["b3"]:offs["b3"] + 1, :].astype(jnp.float32)

    h = jnp.dot(x, w1, preferred_element_type=jnp.float32)
    h = jnp.maximum(h + b1, 0.0)

    h = jnp.dot(h.astype(wdt), w2, preferred_element_type=jnp.float32)
    h = jnp.maximum(h + b2, 0.0)

    y = jnp.dot(h.astype(wdt), w3, preferred_element_type=jnp.float32) + b3
    a = ma_ref[0] * jnp.tanh(y)      # full-width tanh: EUP slot is otherwise idle

    o_ref[...] = a[:, :AP].astype(o_ref.dtype)   # AP is a multiple of 128 -> unmasked vst


def actor_forward(state, goal, packed_params, max_action_arr, *, action_dim,
                  block_b=1024, min_grid_steps=2):
    """state: (B, state_dim) f32, goal: (B, goal_dim) f32,
    packed_params: slab from pack_params, max_action_arr: (1,) f32."""
    B, state_dim = state.shape
    goal_dim = goal.shape[1]
    R, C = packed_params.shape
    Kp = _round_up(state_dim + goal_dim, SUBLANE)
    offs, total_rows = _segment_offsets(Kp, C)
    assert total_rows == R
    AP = _round_up(action_dim, LANE)

    # One fused [state | goal | 0-pad] input -> a single sublane-aligned layer-1 dot.
    x = jnp.concatenate([state, goal], axis=1)
    if Kp > x.shape[1]:
        x = jnp.pad(x, ((0, 0), (0, Kp - x.shape[1])))

    # Tile so the grid has >= min_grid_steps steps when B allows it (v7x: 2 TCs both
    # get work; pipelining overlaps next-tile DMA with compute), capped at block_b.
    TB = _round_up(max(1, pl.cdiv(B, min_grid_steps)), SUBLANE)
    TB = min(TB, block_b, _round_up(B, SUBLANE))
    grid = (pl.cdiv(B, TB),)
    Bp = grid[0] * TB

    kernel = functools.partial(_actor_kernel, offs=offs, Kp=Kp, C=C, AP=AP)

    flops = 2 * Bp * C * (Kp + 2 * C)                 # padded shapes actually run
    transcendentals = Bp * C                          # tanh over padded lane width
    bytes_accessed = (x.dtype.itemsize * B * Kp
                      + packed_params.dtype.itemsize * R * C
                      + 4 * B * AP + 4)

    out = pl.pallas_call(
        kernel,
        out_shape=jax.ShapeDtypeStruct((B, AP), jnp.float32),
        grid=grid,
        in_specs=[
            pl.BlockSpec(memory_space=pltpu.MemorySpace.SMEM),   # max_action scalar
            pl.BlockSpec((TB, Kp), lambda i: (i, 0)),            # [state|goal] tile
            pl.BlockSpec((R, C), lambda i: (0, 0)),              # resident param slab
        ],
        out_specs=pl.BlockSpec((TB, AP), lambda i: (i, 0)),      # lane-dense output
        compiler_params=pltpu.CompilerParams(
            dimension_semantics=("parallel",)),
        cost_estimate=pl.CostEstimate(
            flops=int(flops),
            transcendentals=int(transcendentals),
            bytes_accessed=int(bytes_accessed)),
    )(max_action_arr, x, packed_params)

    return out[:, :action_dim]


# ---------------------------------------------------------------------------
# Pure-JAX reference pieces (for the correctness check only)
# ---------------------------------------------------------------------------
def goal_emb_ref(state, goal, goal_dim):
    a1_pos, finger, goal_pos = state[:, 6:9], state[:, 9:12], goal[:, 0:3]
    if goal_dim == 6:
        obs_pos = goal[:, 3:6]
        vec_1, vec_2 = goal_pos - a1_pos, goal_pos - finger
        vec_3, vec_4 = obs_pos - a1_pos, obs_pos - finger
        return jnp.concatenate([state, vec_1, vec_2, vec_3, vec_4], axis=1)
    obs1, obs2, obs3 = goal[:, 3:6], goal[:, 6:9], goal[:, 9:12]
    vecs = [goal_pos - a1_pos, obs1 - a1_pos, obs2 - a1_pos, obs3 - a1_pos,
            goal_pos - finger, obs1 - finger, obs2 - finger, obs3 - finger]
    return jnp.concatenate([state] + vecs, axis=1)


# ---------------------------------------------------------------------------
# Deterministic parameter init (PyTorch nn.Linear style: U(-1/sqrt(in), +))
# Weights stored transposed vs. PyTorch: (in_features, out_features).
# ---------------------------------------------------------------------------
def init_params(key, state_dim, goal_dim, hidden_dim, action_dim):
    in_dim = state_dim + goal_dim * 2

    def linear(k, fan_in, fan_out):
        kw, kb = jax.random.split(k)
        bound = 1.0 / jnp.sqrt(fan_in)
        w = jax.random.uniform(kw, (fan_in, fan_out), jnp.float32, -bound, bound)
        b = jax.random.uniform(kb, (1, fan_out), jnp.float32, -bound, bound)
        return w, b

    k1, k2, k3 = jax.random.split(key, 3)
    w1, b1 = linear(k1, in_dim, hidden_dim)
    w2, b2 = linear(k2, hidden_dim, hidden_dim)
    w3, b3 = linear(k3, hidden_dim, action_dim)
    return {"w1": w1, "b1": b1, "w2": w2, "b2": b2, "w3": w3, "b3": b3}


if __name__ == "__main__":
    batch = 8
    state_dim = 17      # must be >= 12 (uses state[:, 6:12])
    goal_dim = 6        # goal_emb's 6-dim branch
    hidden_dim = 32
    action_dim = 4
    max_action = 2.0

    key = jax.random.PRNGKey(0)
    kp, ks, kg = jax.random.split(key, 3)

    params = init_params(kp, state_dim, goal_dim, hidden_dim, action_dim)
    state = jax.random.normal(ks, (batch, state_dim), jnp.float32)
    goal = jax.random.normal(kg, (batch, goal_dim), jnp.float32)
    max_action_arr = jnp.full((1,), max_action, jnp.float32)

    # Reference: original goal_emb path + 3-layer MLP, all in plain JAX.
    vec = goal_emb_ref(state, goal, goal_dim)
    h1 = jnp.maximum(vec @ params["w1"] + params["b1"], 0.0)
    h2 = jnp.maximum(h1 @ params["w2"] + params["b2"], 0.0)
    ref = max_action * jnp.tanh(h2 @ params["w3"] + params["b3"])

    # 1) exact-semantics f32 weight slab.
    packed_f32 = pack_params(params, state_dim, goal_dim, hidden_dim, action_dim)
    out_f32 = actor_forward(state, goal, packed_f32, max_action_arr,
                            action_dim=action_dim)
    out_f32 = jax.block_until_ready(out_f32)
    assert out_f32.shape == (batch, action_dim)
    assert jnp.allclose(out_f32, ref, atol=1e-5), "f32 mismatch vs reference"

    # 2) bf16 weight slab (recommended on v6e/v7x): weights/activations rounded to
    #    bf16 only at the MXU boundary, accumulation stays f32.
    packed_bf16 = pack_params(params, state_dim, goal_dim, hidden_dim, action_dim,
                              dtype=jnp.bfloat16)
    out_bf16 = actor_forward(state, goal, packed_bf16, max_action_arr,
                             action_dim=action_dim)
    out_bf16 = jax.block_until_ready(out_bf16)
    assert out_bf16.shape == (batch, action_dim)
    assert jnp.allclose(out_bf16, ref, atol=5e-2), "bf16 mismatch vs reference"

    print("KERNEL_OK")
</pallas_src>

<mosaic_0001>
module attributes {stable_mosaic.version = 11 : i64} {
  func.func @_actor_kernel(%arg0: i32, %arg1: memref<1xf32, #tpu.memory_space<smem>>, %arg2: memref<8x24xf32, #tpu.memory_space<vmem>>, %arg3: memref<304x128xf32, #tpu.memory_space<vmem>>, %arg4: memref<8x128xf32, #tpu.memory_space<vmem>>) attributes {dimension_semantics = [#tpu.dimension_semantics<parallel>], iteration_bounds = array<i64: 1>, scalar_prefetch = 0 : i64, scratch_operands = 0 : i64, tpu.core_type = #tpu.core_type<tc>, window_params = [{transform_indices = @transform_0, window_bounds = array<i64: 1>}, {transform_indices = @transform_1, window_bounds = array<i64: 8, 24>}, {pipeline_mode = #tpu.pipeline_mode<synchronous>, transform_indices = @transform_2, window_bounds = array<i64: 304, 128>}, {transform_indices = @transform_3, window_bounds = array<i64: 8, 128>}]} {
    %c0 = arith.constant 0 : index
    %c0_0 = arith.constant 0 : index
    %0 = vector.load %arg2[%c0, %c0_0] : memref<8x24xf32, #tpu.memory_space<vmem>>, vector<8x24xf32>
    %c0_1 = arith.constant 0 : index
    %c0_2 = arith.constant 0 : index
    %1 = vector.load %arg3[%c0_1, %c0_2] : memref<304x128xf32, #tpu.memory_space<vmem>>, vector<24x128xf32>
    %c24 = arith.constant 24 : index
    %c0_3 = arith.constant 0 : index
    %2 = vector.load %arg3[%c24, %c0_3] : memref<304x128xf32, #tpu.memory_space<vmem>>, vector<1x128xf32>
    %c32 = arith.constant 32 : index
    %c0_4 = arith.constant 0 : index
    %3 = vector.load %arg3[%c32, %c0_4] : memref<304x128xf32, #tpu.memory_space<vmem>>, vector<128x128xf32>
    %c160 = arith.constant 160 : index
    %c0_5 = arith.constant 0 : index
    %4 = vector.load %arg3[%c160, %c0_5] : memref<304x128xf32, #tpu.memory_space<vmem>>, vector<1x128xf32>
    %c168 = arith.constant 168 : index
    %c0_6 = arith.constant 0 : index
    %5 = vector.load %arg3[%c168, %c0_6] : memref<304x128xf32, #tpu.memory_space<vmem>>, vector<128x128xf32>
    %c296 = arith.constant 296 : index
    %c0_7 = arith.constant 0 : index
    %6 = vector.load %arg3[%c296, %c0_7] : memref<304x128xf32, #tpu.memory_space<vmem>>, vector<1x128xf32>
    %cst = arith.constant dense<0.000000e+00> : vector<8x128xf32>
    %7 = tpu.matmul %0, %1, %cst {dimension_numbers = #tpu.dot_dimension_numbers<[1], [0], [0], [1], [0, 0, 1, 1], [], []>} : vector<8x24xf32>, vector<24x128xf32>, vector<8x128xf32> -> vector<8x128xf32>
    %8 = vector.broadcast %2 : vector<1x128xf32> to vector<8x128xf32>
    %9 = arith.addf %7, %8 : vector<8x128xf32>
    %cst_8 = arith.constant 0.000000e+00 : f32
    %10 = vector.broadcast %cst_8 : f32 to vector<8x128xf32>
    %11 = arith.maximumf %9, %10 : vector<8x128xf32>
    %cst_9 = arith.constant dense<0.000000e+00> : vector<8x128xf32>
    %12 = tpu.matmul %11, %3, %cst_9 {dimension_numbers = #tpu.dot_dimension_numbers<[1], [0], [0], [1], [0, 0, 1, 1], [], []>} : vector<8x128xf32>, vector<128x128xf32>, vector<8x128xf32> -> vector<8x128xf32>
    %13 = vector.broadcast %4 : vector<1x128xf32> to vector<8x128xf32>
    %14 = arith.addf %12, %13 : vector<8x128xf32>
    %cst_10 = arith.constant 0.000000e+00 : f32
    %15 = vector.broadcast %cst_10 : f32 to vector<8x128xf32>
    %16 = arith.maximumf %14, %15 : vector<8x128xf32>
    %cst_11 = arith.constant dense<0.000000e+00> : vector<8x128xf32>
    %17 = tpu.matmul %16, %5, %cst_11 {dimension_numbers = #tpu.dot_dimension_numbers<[1], [0], [0], [1], [0, 0, 1, 1], [], []>} : vector<8x128xf32>, vector<128x128xf32>, vector<8x128xf32> -> vector<8x128xf32>
    %18 = vector.broadcast %6 : vector<1x128xf32> to vector<8x128xf32>
    %19 = arith.addf %17, %18 : vector<8x128xf32>
    %c0_12 = arith.constant 0 : index
    %20 = memref.load %arg1[%c0_12] : memref<1xf32, #tpu.memory_space<smem>>
    %21 = math.tanh %19 : vector<8x128xf32>
    %22 = vector.broadcast %20 : f32 to vector<8x128xf32>
    %23 = arith.mulf %22, %21 : vector<8x128xf32>
    %c0_13 = arith.constant 0 : index
    %c0_14 = arith.constant 0 : index
    %24 = vector.load %arg4[%c0_13, %c0_14] : memref<8x128xf32, #tpu.memory_space<vmem>>, vector<8x128xf32>
    tpu.vector_store %arg4[%c0_13, %c0_14], %23 {strides = array<i32>} : memref<8x128xf32, #tpu.memory_space<vmem>>, vector<8x128xf32>,
    return
  }
  func.func @transform_0(%arg0: i32) -> i32 {
    %c0_i32 = arith.constant 0 : i32
    %c0_i32_0 = arith.constant 0 : i32
    return %c0_i32 : i32
  }
  func.func @transform_1(%arg0: i32) -> (i32, i32) {
    %c0_i32 = arith.constant 0 : i32
    %c0_i32_0 = arith.constant 0 : i32
    return %arg0, %c0_i32 : i32, i32
  }
  func.func @transform_2(%arg0: i32) -> (i32, i32) {
    %c0_i32 = arith.constant 0 : i32
    %c0_i32_0 = arith.constant 0 : i32
    %c0_i32_1 = arith.constant 0 : i32
    return %c0_i32, %c0_i32_0 : i32, i32
  }
  func.func @transform_3(%arg0: i32) -> (i32, i32) {
    %c0_i32 = arith.constant 0 : i32
    %c0_i32_0 = arith.constant 0 : i32
    return %arg0, %c0_i32 : i32, i32
  }
}

</mosaic_0001>

<llo_original>
// kernel: tpu_custom_call.1
$region0: #{tpu_custom_call.1}
  #allocation0 [shape = 'u32[]', space=smem, size = 0x4, offset = 0x4, fixed_abs, tag = 'smem constant byte address 0x4 - core index']
  #allocation1 [shape = 'u32[72,128]{1,0:T(1,128)}', space=vmem, size = 0x9000, scoped, tag = 'internal scratch']
  #allocation2 [shape = 'f32[1]{0:T(128)S(6)}', space=smem, size = 0x200, scoped, tag = 'scoped memory for tpu_custom_call.1']
  %s0 = inlined_call_operand.<no memory space> [shape: f32[1], index: 0, kind: input, shape index: {}]
  %s1 = inlined_call_operand.hbm [shape: f32[8,24], index: 1, kind: input, shape index: {}]
  %s2 = inlined_call_operand.hbm [shape: f32[304,128], index: 2, kind: input, shape index: {}]
  %s3 = inlined_call_operand.hbm [shape: f32[8,128], index: 3, kind: output, shape index: {}]
  %s4 = sld [smem:[#allocation0]]
  $region30: #{tpu_custom_call.1} parent=0
    _
  %s6 = ssub.s32 1, %s4
  %s7 = scalar_select 0, %s6, %s4
  %8 = sst [smem:[#allocation2]] %s0
  $region1: #{tpu_custom_call.1} parent=0
    #allocation3 [shape = 'u8[4096]{0}', space=vmem, size = 0x1000, scoped, tag = 'input window, operand 1, single buffered']
    #allocation4 [shape = 's32[1]{0}', space=sflag, size = 0x4, scoped, tag = 'scoped memory for tpu_custom_call.1']
    #allocation5 [shape = 's32[1]{0}', space=sflag, size = 0x4, scoped, tag = 'scoped memory for tpu_custom_call.1']
    #allocation6 [shape = 'u8[155648]{0}', space=vmem, size = 0x26000, scoped, tag = 'input window, operand 2, single buffered']
    #allocation7 [shape = 's32[1]{0}', space=sflag, size = 0x4, scoped, tag = 'scoped memory for tpu_custom_call.1']
    #allocation8 [shape = 'u8[4096]{0}', space=vmem, size = 0x1000, scoped, tag = 'output window, operand 0, single buffered']
    %9 = vsyncpa [#allocation4], 0
    %10 = vsyncpa [#allocation7], 0
    %11 = vsyncpa [#allocation5], 0
    // Predicated region
    $region2: #{tpu_custom_call.1} parent=1 // pred_check
      _
    $region3: #{tpu_custom_call.1} parent=1 // pred_check_branch
      %13 = sbr.rel (0) target = $region5
    $region4: #{tpu_custom_call.1} parent=1 // pred_region
      _
    $region5: #{tpu_custom_call.1} parent=1 // pred_fallthru
      _
    // Predicated region
    $region6: #{tpu_custom_call.1} parent=1 // pred_check
      _
    $region7: #{tpu_custom_call.1} parent=1 // pred_check_branch
      %15 = sbr.rel (0) target = $region9
    $region8: #{tpu_custom_call.1} parent=1 // pred_region
      %17 = vsyncadd [#allocation4], 0
      %s19 = sshll.u32 %s1, 4
      %s20 = int_to_ptr.hbm [resolvable:$true] %s19
      %s21 = sshll.u32 [#allocation3], 4
      %s22 = int_to_ptr.vmem [resolvable:$true] %s21
      %24 = dma.hbm_to_vmem [thread:$0]  %s20, 128, %s22, [#allocation4]
    $region9: #{tpu_custom_call.1} parent=1 // pred_fallthru
      _
    // Predicated region
    $region10: #{tpu_custom_call.1} parent=1 // pred_check
      _
    $region11: #{tpu_custom_call.1} parent=1 // pred_check_branch
      %26 = sbr.rel (0) target = $region13
    $region12: #{tpu_custom_call.1} parent=1 // pred_region
      %28 = vsyncadd [#allocation7], 0
      %s29 = sshll.u32 %s2, 4
      %s30 = int_to_ptr.hbm [resolvable:$true] %s29
      %s31 = sshll.u32 [#allocation6], 4
      %s32 = int_to_ptr.vmem [resolvable:$true] %s31
      %37 = dma.hbm_to_vmem [thread:$0]  %s30, 4864, %s32, [#allocation7], 128, 128, 8
    $region13: #{tpu_custom_call.1} parent=1 // pred_fallthru
      _
    // Predicated region
    $region14: #{tpu_custom_call.1} parent=1 // pred_check
      _
    $region15: #{tpu_custom_call.1} parent=1 // pred_check_branch
      %39 = sbr.rel (0) target = $region17
    $region16: #{tpu_custom_call.1} parent=1 // pred_region
      %41 = dma.done [#allocation4], 128
    $region17: #{tpu_custom_call.1} parent=1 // pred_fallthru
      _
    // Predicated region
    $region18: #{tpu_custom_call.1} parent=1 // pred_check
      _
    $region19: #{tpu_custom_call.1} parent=1 // pred_check_branch
      %43 = sbr.rel (0) target = $region21
    $region20: #{tpu_custom_call.1} parent=1 // pred_region
      %45 = dma.done [#allocation7], 4864
    $region21: #{tpu_custom_call.1} parent=1 // pred_fallthru
      _
    %v46 = vld [vmem:[#allocation3] sm:$0xff]
    %v47 = vld [vmem:[#allocation6] sm:$0xff]
    %v48 = vld [vmem:[#allocation6 + $0x8] sm:$0xff]
    %v49 = vld [vmem:[#allocation6 + $0x10] sm:$0xff]
    %v50 = vld [vmem:[#allocation6 + $0x18] sm:$0x1]
    %v51 = vld [vmem:[#allocation6 + $0x20] sm:$0xff]
    %v52 = vld [vmem:[#allocation6 + $0x28] sm:$0xff]
    %v53 = vld [vmem:[#allocation6 + $0x30] sm:$0xff]
    %v54 = vld [vmem:[#allocation6 + $0x38] sm:$0xff]
    %v55 = vld [vmem:[#allocation6 + $0x40] sm:$0xff]
    %v56 = vld [vmem:[#allocation6 + $0x48] sm:$0xff]
    %v57 = vld [vmem:[#allocation6 + $0x50] sm:$0xff]
    %v58 = vld [vmem:[#allocation6 + $0x58] sm:$0xff]
    %v59 = vld [vmem:[#allocation6 + $0x60] sm:$0xff]
    %v60 = vld [vmem:[#allocation6 + $0x68] sm:$0xff]
    %v61 = vld [vmem:[#allocation6 + $0x70] sm:$0xff]
    %v62 = vld [vmem:[#allocation6 + $0x78] sm:$0xff]
    %v63 = vld [vmem:[#allocation6 + $0x80] sm:$0xff]
    %v64 = vld [vmem:[#allocation6 + $0x88] sm:$0xff]
    %v65 = vld [vmem:[#allocation6 + $0x90] sm:$0xff]
    %v66 = vld [vmem:[#allocation6 + $0x98] sm:$0xff]
    %v67 = vld [vmem:[#allocation6 + $0xa0] sm:$0x1]
    %v68 = vld [vmem:[#allocation6 + $0xa8] sm:$0xff]
    %v69 = vld [vmem:[#allocation6 + $0xb0] sm:$0xff]
    %v70 = vld [vmem:[#allocation6 + $0xb8] sm:$0xff]
    %v71 = vld [vmem:[#allocation6 + $0xc0] sm:$0xff]
    %v72 = vld [vmem:[#allocation6 + $0xc8] sm:$0xff]
    %v73 = vld [vmem:[#allocation6 + $0xd0] sm:$0xff]
    %v74 = vld [vmem:[#allocation6 + $0xd8] sm:$0xff]
    %v75 = vld [vmem:[#allocation6 + $0xe0] sm:$0xff]
    %v76 = vld [vmem:[#allocation6 + $0xe8] sm:$0xff]
    %v77 = vld [vmem:[#allocation6 + $0xf0] sm:$0xff]
    %v78 = vld [vmem:[#allocation6 + $0xf8] sm:$0xff]
    %v79 = vld [vmem:[#allocation6 + $0x100] sm:$0xff]
    %v80 = vld [vmem:[#allocation6 + $0x108] sm:$0xff]
    %v81 = vld [vmem:[#allocation6 + $0x110] sm:$0xff]
    %v82 = vld [vmem:[#allocation6 + $0x118] sm:$0xff]
    %v83 = vld [vmem:[#allocation6 + $0x120] sm:$0xff]
    %v84 = vld [vmem:[#allocation6 + $0x128] sm:$0x1]
    %v85 = vperm.slane %v50, 0
    %vm86 = vcmask 195584
    %v88 = vsel %vm86, %v46, 0
    %90 = vmatpush.msra.mxu0 0.0
    %91 = vmatpush.msra.mxu0 0.0
    %92 = vmatpush.msra.mxu0 0.0
    %93 = vmatpush.msra.mxu0 0.0
    %94 = vmatpush.msra.mxu0 0.0
    %95 = vmatpush.msra.mxu0 0.0
    %96 = vmatpush.msra.mxu0 0.0
    %97 = vmatpush.msra.mxu0 0.0
    %98 = vmatpush.msra.mxu0 0.0
    %99 = vmatpush.msra.mxu0 0.0
    %100 = vmatpush.msra.mxu0 0.0
    %101 = vmatpush.msra.mxu0 0.0
    %102 = vmatpush.msra.mxu0 0.0
    %103 = vmatpush.msra.mxu0 %v49
    %104 = vmatpush.msra.mxu0 %v48
    %105 = vmatpush.msra.mxu0 %v47
    %106 = vmatmul.f32.gmra.mxu0 %v88
    %v107 = vpop.f32.mrf.mxu0
    %v108 = vadd.f32 %v85, %v107
    %109 = vdwg.mxu0
    %v110 = vmax.f32 %v108, 0.0
    %v111 = vperm.slane %v67, 0
    %112 = vmatpush.msra.mxu0 %v66
    %113 = vmatpush.msra.mxu0 %v65
    %114 = vmatpush.msra.mxu0 %v64
    %115 = vmatpush.msra.mxu0 %v63
    %116 = vmatpush.msra.mxu0 %v62
    %117 = vmatpush.msra.mxu0 %v61
    %118 = vmatpush.msra.mxu0 %v60
    %119 = vmatpush.msra.mxu0 %v59
    %120 = vmatpush.msra.mxu0 %v58
    %121 = vmatpush.msra.mxu0 %v57
    %122 = vmatpush.msra.mxu0 %v56
    %123 = vmatpush.msra.mxu0 %v55
    %124 = vmatpush.msra.mxu0 %v54
    %125 = vmatpush.msra.mxu0 %v53
    %126 = vmatpush.msra.mxu0 %v52
    %127 = vmatpush.msra.mxu0 %v51
    %128 = vmatmul.f32.gmra.mxu0 %v110
    %v129 = vpop.f32.mrf.mxu0
    %v130 = vadd.f32 %v111, %v129
    %131 = vdwg.mxu0
    %v132 = vmax.f32 %v130, 0.0
    %v133 = vperm.slane %v84, 0
    %134 = vmatpush.msra.mxu0 %v83
    %135 = vmatpush.msra.mxu0 %v82
    %136 = vmatpush.msra.mxu0 %v81
    %137 = vmatpush.msra.mxu0 %v80
    %138 = vmatpush.msra.mxu0 %v79
    %139 = vmatpush.msra.mxu0 %v78
    %140 = vmatpush.msra.mxu0 %v77
    %141 = vmatpush.msra.mxu0 %v76
    %142 = vmatpush.msra.mxu0 %v75
    %143 = vmatpush.msra.mxu0 %v74
    %144 = vmatpush.msra.mxu0 %v73
    %145 = vmatpush.msra.mxu0 %v72
    %146 = vmatpush.msra.mxu0 %v71
    %147 = vmatpush.msra.mxu0 %v70
    %148 = vmatpush.msra.mxu0 %v69
    %149 = vmatpush.msra.mxu0 %v68
    %150 = vmatmul.f32.gmra.mxu0 %v132
    %v151 = vpop.f32.mrf.mxu0
    %v152 = vadd.f32 %v133, %v151
    %153 = vdwg.mxu0
    %s154 = sld [smem:[#allocation2]]
    %v155 = vtanh.pop %v152
    %v156 = vstv %s154
    %v157 = vmul.f32 %v156, %v155
    %158 = vst [vmem:[#allocation8] sm:$0xff] %v157
    // Predicated region
    $region22: #{tpu_custom_call.1} parent=1 // pred_check
      _
    $region23: #{tpu_custom_call.1} parent=1 // pred_check_branch
      %160 = sbr.rel (0) target = $region25
    $region24: #{tpu_custom_call.1} parent=1 // pred_region
      %162 = vsyncadd [#allocation5], 0
      %s164 = sshll.u32 [#allocation8], 4
      %s165 = int_to_ptr.vmem [resolvable:$true] %s164
      %s166 = sshll.u32 %s3, 4
      %s167 = int_to_ptr.hbm [resolvable:$true] %s166
      %169 = dma.vmem_to_hbm [thread:$0]  %s165, 128, %s167, [#allocation5]
    $region25: #{tpu_custom_call.1} parent=1 // pred_fallthru
      _
    // Predicated region
    $region26: #{tpu_custom_call.1} parent=1 // pred_check
      _
    $region27: #{tpu_custom_call.1} parent=1 // pred_check_branch
      %171 = sbr.rel (0) target = $region29
    $region28: #{tpu_custom_call.1} parent=1 // pred_region
      %173 = dma.done [#allocation5], 128
    $region29: #{tpu_custom_call.1} parent=1 // pred_fallthru
      _
    %174 = vsyncpa [#allocation4], 1
    %175 = vsyncpa [#allocation7], 1
    %176 = vsyncpa [#allocation5], 1

</llo_original>
